<compile_context>
chip_gen: v6e
topology: v6e:2x2x1
jax: 0.10.0
libtpu: 0.0.40
codegen_flags: <defaults>
</compile_context>

<pallas_src>
import functools
import math

import jax
import jax.numpy as jnp
from jax.experimental import pallas as pl
from jax.experimental.pallas import tpu as pltpu


# ----------------------------------------------------------------------------
# Kernels
# ----------------------------------------------------------------------------
def _projection_partial(v, w1, b1, compute_dtype):
    """relu(v @ W1 + b1) summed over the seq rows of this tile -> (BT, H) f32."""
    bt, st, d = v.shape
    v2 = v.reshape(bt * st, d)
    if v2.dtype != compute_dtype:
        v2 = v2.astype(compute_dtype)          # cast in-kernel (no extra HBM pass)
    h = jnp.dot(v2, w1, preferred_element_type=jnp.float32)
    h = jnp.maximum(h + b1, 0.0)               # ReLU; Dropout = identity (eval mode)
    return h.reshape(bt, st, -1).sum(axis=1)   # partial sum over seq rows


def linear_fusion_single_step_kernel(x_ref, y_ref, w1_ref, b1_ref, w2s_ref,
                                     b2_ref, out_ref, *, compute_dtype):
    """Whole problem in one grid step (tiny B*S): no accumulator needed."""
    w1 = w1_ref[...]
    b1 = b1_ref[...]
    hx = _projection_partial(x_ref[...], w1, b1, compute_dtype)   # (B, H)
    hy = _projection_partial(y_ref[...], w1, b1, compute_dtype)
    w2s = w2s_ref[...]                         # (1, H), already scaled by 1/S
    b2 = b2_ref[0, 0]                          # scalar from SMEM
    pred_x = jnp.sum(hx * w2s, axis=-1, keepdims=True) + b2       # (B, 1)
    pred_y = jnp.sum(hy * w2s, axis=-1, keepdims=True) + b2
    out_ref[...] = (1.0 - jax.nn.sigmoid(pred_y - pred_x)).astype(out_ref.dtype)


def linear_fusion_tiled_kernel(x_ref, y_ref, w1_ref, b1_ref, w2s_ref, b2_ref,
                               out_ref, acc_x_ref, acc_y_ref, *, compute_dtype):
    """Grid = (batch tiles, seq tiles); seq axis is the reduction axis.

    x_ref/y_ref : (BT, ST, D) streamed activation tiles (f32 or bf16 in HBM)
    w1_ref      : (D, H)  resident first-layer weight (compute dtype)
    b1_ref      : (1, H)  f32
    w2s_ref     : (1, H)  f32, W2 row pre-scaled by 1/S (mean folded in)
    b2_ref      : (1, 1)  f32 scalar in SMEM
    out_ref     : (BT, 1) 1 - sigmoid(pred_y - pred_x)
    acc_*_ref   : (BT, H) f32 running sum_s relu(v @ W1 + b1)
    """
    s_idx = pl.program_id(1)

    @pl.when(s_idx == 0)
    def _init():
        acc_x_ref[...] = jnp.zeros_like(acc_x_ref)
        acc_y_ref[...] = jnp.zeros_like(acc_y_ref)

    w1 = w1_ref[...]
    b1 = b1_ref[...]
    acc_x_ref[...] += _projection_partial(x_ref[...], w1, b1, compute_dtype)
    acc_y_ref[...] += _projection_partial(y_ref[...], w1, b1, compute_dtype)

    @pl.when(s_idx == pl.num_programs(1) - 1)
    def _finalize():
        w2s = w2s_ref[...]
        b2 = b2_ref[0, 0]
        # H -> 1 projection as VPU multiply + lane reduce (no N=1 MXU matmul).
        pred_x = jnp.sum(acc_x_ref[...] * w2s, axis=-1, keepdims=True) + b2
        pred_y = jnp.sum(acc_y_ref[...] * w2s, axis=-1, keepdims=True) + b2
        out_ref[...] = (1.0 - jax.nn.sigmoid(pred_y - pred_x)).astype(out_ref.dtype)


# ----------------------------------------------------------------------------
# Tiling / VMEM-budget heuristics
# ----------------------------------------------------------------------------
def _aligned_seq_tile(s, cap, align):
    """Largest divisor of s that is <= cap and a multiple of `align`;
    falls back to the full extent (always a legal block shape)."""
    cap = max(1, min(s, cap))
    for t in range(cap, 0, -1):
        if s % t == 0 and t % align == 0:
            return t
    return s


def _choose_tiles(b, s, d, itemsize):
    align = 16 if itemsize == 2 else 8
    # Tiny problem: one grid step, skip the accumulator pipeline entirely.
    if 2 * b * s * d * itemsize <= (4 << 20):
        return b, s
    # Target ~3 MiB of activation per input per step (amortizes ~0.35us step
    # overhead, keeps double-buffered working set well under VMEM limits).
    rows_target = max(align, (3 << 20) // (d * itemsize))

    # Batch tile: >= 2 tiles so v7x's second TensorCore gets work, and a
    # multiple of 8 so the (BT, 1) output block stays sublane-aligned.
    bt = b
    if b >= 16:
        for cand in range(min(b // 2, max(8, rows_target)), 7, -1):
            if cand % 8 == 0 and b % cand == 0:
                bt = cand
                break

    st = _aligned_seq_tile(s, max(align, rows_target // bt), align)
    return bt, st


def _vmem_limit_bytes(bt, st, d, h, act_itemsize, w_itemsize):
    act = 2 * 2 * bt * st * d * act_itemsize            # x & y, double-buffered
    weights = 2 * (d * h * w_itemsize + 2 * 8 * 128 * 4)  # W1 + padded b1/w2 rows
    acc = 2 * max(bt, 8) * max(h, 128) * 4               # f32 accumulators
    out = 2 * max(bt, 8) * 128 * 4
    budget = int((act + weights + acc + out) * 1.5) + (4 << 20)   # headroom
    # Floor at 16 MiB; cap at 48 MiB so the same tiling stays safe on v7x
    # (64 MiB physical) while raising v5e's 16 MiB scoped default when needed.
    return max(min(budget, 48 << 20), 16 << 20)


# ----------------------------------------------------------------------------
# Wrapper
# ----------------------------------------------------------------------------
def linear_fusion_forward(x, y, w1, b1, w2, b2, *, compute_dtype=jnp.bfloat16):
    """x, y: (B, S, D); w1: (D, H); b1: (1, H); w2: (H, 1); b2: (1, 1) -> (B,)."""
    B, S, D = x.shape
    H = w1.shape[1]

    # Host-side prep touches only the (tiny) weights; activations stream
    # straight from HBM with no extra stack/cast pass.
    w1c = w1.astype(compute_dtype)
    b1f = b1.reshape(1, H).astype(jnp.float32)
    w2s = (w2.reshape(1, H) * (1.0 / S)).astype(jnp.float32)   # fold mean over S
    b2f = b2.reshape(1, 1).astype(jnp.float32)

    act_itemsize = jnp.dtype(x.dtype).itemsize
    BT, ST = _choose_tiles(B, S, D, act_itemsize)
    grid = (B // BT, S // ST)

    vmem_limit = _vmem_limit_bytes(BT, ST, D, H, act_itemsize,
                                   jnp.dtype(compute_dtype).itemsize)

    if grid == (1, 1):
        kernel = functools.partial(linear_fusion_single_step_kernel,
                                   compute_dtype=compute_dtype)
        scratch = []
    else:
        kernel = functools.partial(linear_fusion_tiled_kernel,
                                   compute_dtype=compute_dtype)
        scratch = [pltpu.VMEM((BT, H), jnp.float32),
                   pltpu.VMEM((BT, H), jnp.float32)]

    out = pl.pallas_call(
        kernel,
        out_shape=jax.ShapeDtypeStruct((B, 1), jnp.float32),
        grid_spec=pltpu.PrefetchScalarGridSpec(
            num_scalar_prefetch=0,
            grid=grid,
            in_specs=[
                pl.BlockSpec((BT, ST, D), lambda b, s: (b, s, 0)),   # x streamed
                pl.BlockSpec((BT, ST, D), lambda b, s: (b, s, 0)),   # y streamed
                pl.BlockSpec((D, H), lambda b, s: (0, 0)),           # W1 resident
                pl.BlockSpec((1, H), lambda b, s: (0, 0)),           # b1 resident
                pl.BlockSpec((1, H), lambda b, s: (0, 0)),           # W2/S row resident
                pl.BlockSpec(memory_space=pltpu.MemorySpace.SMEM),   # b2 scalar
            ],
            out_specs=pl.BlockSpec((BT, 1), lambda b, s: (b, 0)),
            scratch_shapes=scratch,
        ),
        compiler_params=pltpu.CompilerParams(
            dimension_semantics=("parallel", "arbitrary"),
            vmem_limit_bytes=vmem_limit,
        ),
    )(x, y, w1c, b1f, w2s, b2f)
    return out[:, 0]                                     # (B,), matches PyTorch forward


# ----------------------------------------------------------------------------
# Reference / params (mirror the PyTorch module)
# ----------------------------------------------------------------------------
def init_params(key, input_dim=768, hidden_dim=128):
    """Mirrors BaseFusion._init_weights: xavier_uniform_ weights, zero biases."""
    k1, k2 = jax.random.split(key)
    bound1 = math.sqrt(6.0 / (input_dim + hidden_dim))
    bound2 = math.sqrt(6.0 / (hidden_dim + 1))
    w1 = jax.random.uniform(k1, (input_dim, hidden_dim), jnp.float32,
                            minval=-bound1, maxval=bound1)
    b1 = jnp.zeros((1, hidden_dim), jnp.float32)
    w2 = jax.random.uniform(k2, (hidden_dim, 1), jnp.float32,
                            minval=-bound2, maxval=bound2)
    b2 = jnp.zeros((1, 1), jnp.float32)
    return w1, b1, w2, b2


def reference_forward(x, y, w1, b1, w2, b2):
    def predict(v):
        h = jnp.maximum(jnp.einsum('bsd,dh->bsh', v, w1) + b1[0], 0.0)
        z = jnp.einsum('bsh,hk->bsk', h, w2) + b2[0]
        return jnp.mean(z, axis=(1, 2))
    return 1.0 - jax.nn.sigmoid(predict(y) - predict(x))


# ----------------------------------------------------------------------------
# Self-test
# ----------------------------------------------------------------------------
if __name__ == "__main__":
    D, H = 768, 128
    key = jax.random.PRNGKey(0)

    def run_case(B, S, kseed):
        kx, ky, kp = jax.random.split(jax.random.PRNGKey(kseed), 3)
        x = jax.random.normal(kx, (B, S, D), jnp.float32)
        y = jax.random.normal(ky, (B, S, D), jnp.float32)
        w1, b1, w2, b2 = init_params(kp, input_dim=D, hidden_dim=H)
        ref = jax.block_until_ready(reference_forward(x, y, w1, b1, w2, b2))

        # Structural check: f32 matmul path.
        out_f32 = jax.block_until_ready(
            linear_fusion_forward(x, y, w1, b1, w2, b2,
                                  compute_dtype=jnp.float32))
        assert out_f32.shape == (B,)
        assert jnp.allclose(out_f32, ref, atol=2e-3, rtol=2e-3), (out_f32, ref)

        # Fast path: bf16 MXU inputs with f32 accumulation (expected
        # quantization-level error vs. the f32 reference).
        out_bf16 = jax.block_until_ready(
            linear_fusion_forward(x, y, w1, b1, w2, b2,
                                  compute_dtype=jnp.bfloat16))
        assert out_bf16.shape == (B,)
        assert jnp.allclose(out_bf16, ref, atol=2e-2, rtol=2e-2), (out_bf16, ref)

    # Small shape from the task spec -> single-step kernel path.
    run_case(B=2, S=8, kseed=0)
    # Moderately larger shape -> tiled accumulator path (grid with >1 seq step).
    run_case(B=4, S=512, kseed=1)

    print("KERNEL_OK")
</pallas_src>

<mosaic_0001>
module attributes {stable_mosaic.version = 11 : i64} {
  func.func @linear_fusion_single_step_kernel(%arg0: i32, %arg1: i32, %arg2: memref<2x8x768xf32, #tpu.memory_space<vmem>>, %arg3: memref<2x8x768xf32, #tpu.memory_space<vmem>>, %arg4: memref<768x128xf32, #tpu.memory_space<vmem>>, %arg5: memref<1x128xf32, #tpu.memory_space<vmem>>, %arg6: memref<1x128xf32, #tpu.memory_space<vmem>>, %arg7: memref<1x1xf32, #tpu.memory_space<smem>>, %arg8: memref<2x1xf32, #tpu.memory_space<vmem>>) attributes {dimension_semantics = [#tpu.dimension_semantics<parallel>, #tpu.dimension_semantics<arbitrary>], iteration_bounds = array<i64: 1, 1>, scalar_prefetch = 0 : i64, scratch_operands = 0 : i64, tpu.core_type = #tpu.core_type<tc>, window_params = [{transform_indices = @transform_0, window_bounds = array<i64: 2, 8, 768>}, {transform_indices = @transform_1, window_bounds = array<i64: 2, 8, 768>}, {pipeline_mode = #tpu.pipeline_mode<synchronous>, transform_indices = @transform_2, window_bounds = array<i64: 768, 128>}, {pipeline_mode = #tpu.pipeline_mode<synchronous>, transform_indices = @transform_3, window_bounds = array<i64: 1, 128>}, {pipeline_mode = #tpu.pipeline_mode<synchronous>, transform_indices = @transform_4, window_bounds = array<i64: 1, 128>}, {transform_indices = @transform_5, window_bounds = array<i64: 1, 1>}, {transform_indices = @transform_6, window_bounds = array<i64: 2, 1>}]} {
    %c0 = arith.constant 0 : index
    %c0_0 = arith.constant 0 : index
    %0 = vector.load %arg4[%c0, %c0_0] : memref<768x128xf32, #tpu.memory_space<vmem>>, vector<768x128xf32>
    %c0_1 = arith.constant 0 : index
    %c0_2 = arith.constant 0 : index
    %1 = vector.load %arg5[%c0_1, %c0_2] : memref<1x128xf32, #tpu.memory_space<vmem>>, vector<1x128xf32>
    %c0_3 = arith.constant 0 : index
    %c0_4 = arith.constant 0 : index
    %c0_5 = arith.constant 0 : index
    %2 = vector.load %arg2[%c0_3, %c0_4, %c0_5] : memref<2x8x768xf32, #tpu.memory_space<vmem>>, vector<2x8x768xf32>
    %3 = vector.shape_cast %2 : vector<2x8x768xf32> to vector<16x768xf32>
    %cst = arith.constant dense<0.000000e+00> : vector<16x128xf32>
    %4 = tpu.matmul %3, %0, %cst {dimension_numbers = #tpu.dot_dimension_numbers<[1], [0], [0], [1], [0, 0, 1, 1], [], []>} : vector<16x768xf32>, vector<768x128xf32>, vector<16x128xf32> -> vector<16x128xf32>
    %5 = vector.broadcast %1 : vector<1x128xf32> to vector<16x128xf32>
    %6 = arith.addf %4, %5 : vector<16x128xf32>
    %cst_6 = arith.constant 0.000000e+00 : f32
    %7 = vector.broadcast %cst_6 : f32 to vector<16x128xf32>
    %8 = arith.maximumf %6, %7 : vector<16x128xf32>
    %9 = vector.shape_cast %8 : vector<16x128xf32> to vector<2x8x128xf32>
    %cst_7 = arith.constant dense<0.000000e+00> : vector<2x128xf32>
    %10 = vector.multi_reduction <add>, %9, %cst_7 [1] : vector<2x8x128xf32> to vector<2x128xf32>
    %c0_8 = arith.constant 0 : index
    %c0_9 = arith.constant 0 : index
    %c0_10 = arith.constant 0 : index
    %11 = vector.load %arg3[%c0_8, %c0_9, %c0_10] : memref<2x8x768xf32, #tpu.memory_space<vmem>>, vector<2x8x768xf32>
    %12 = vector.shape_cast %11 : vector<2x8x768xf32> to vector<16x768xf32>
    %cst_11 = arith.constant dense<0.000000e+00> : vector<16x128xf32>
    %13 = tpu.matmul %12, %0, %cst_11 {dimension_numbers = #tpu.dot_dimension_numbers<[1], [0], [0], [1], [0, 0, 1, 1], [], []>} : vector<16x768xf32>, vector<768x128xf32>, vector<16x128xf32> -> vector<16x128xf32>
    %14 = vector.broadcast %1 : vector<1x128xf32> to vector<16x128xf32>
    %15 = arith.addf %13, %14 : vector<16x128xf32>
    %cst_12 = arith.constant 0.000000e+00 : f32
    %16 = vector.broadcast %cst_12 : f32 to vector<16x128xf32>
    %17 = arith.maximumf %15, %16 : vector<16x128xf32>
    %18 = vector.shape_cast %17 : vector<16x128xf32> to vector<2x8x128xf32>
    %cst_13 = arith.constant dense<0.000000e+00> : vector<2x128xf32>
    %19 = vector.multi_reduction <add>, %18, %cst_13 [1] : vector<2x8x128xf32> to vector<2x128xf32>
    %c0_14 = arith.constant 0 : index
    %c0_15 = arith.constant 0 : index
    %20 = vector.load %arg6[%c0_14, %c0_15] : memref<1x128xf32, #tpu.memory_space<vmem>>, vector<1x128xf32>
    %c0_16 = arith.constant 0 : index
    %c0_17 = arith.constant 0 : index
    %21 = memref.load %arg7[%c0_16, %c0_17] : memref<1x1xf32, #tpu.memory_space<smem>>
    %22 = vector.broadcast %20 : vector<1x128xf32> to vector<2x128xf32>
    %23 = arith.mulf %10, %22 : vector<2x128xf32>
    %cst_18 = arith.constant dense<0.000000e+00> : vector<2xf32>
    %24 = vector.multi_reduction <add>, %23, %cst_18 [1] : vector<2x128xf32> to vector<2xf32>
    %25 = vector.shape_cast %24 : vector<2xf32> to vector<2x1xf32>
    %26 = vector.broadcast %21 : f32 to vector<2x1xf32>
    %27 = arith.addf %25, %26 : vector<2x1xf32>
    %28 = vector.broadcast %20 : vector<1x128xf32> to vector<2x128xf32>
    %29 = arith.mulf %19, %28 : vector<2x128xf32>
    %cst_19 = arith.constant dense<0.000000e+00> : vector<2xf32>
    %30 = vector.multi_reduction <add>, %29, %cst_19 [1] : vector<2x128xf32> to vector<2xf32>
    %31 = vector.shape_cast %30 : vector<2xf32> to vector<2x1xf32>
    %32 = vector.broadcast %21 : f32 to vector<2x1xf32>
    %33 = arith.addf %31, %32 : vector<2x1xf32>
    %34 = arith.subf %33, %27 : vector<2x1xf32>
    %35 = arith.negf %34 : vector<2x1xf32>
    %36 = math.exp %35 : vector<2x1xf32>
    %cst_20 = arith.constant 1.000000e+00 : f32
    %37 = vector.broadcast %cst_20 : f32 to vector<2x1xf32>
    %38 = arith.addf %37, %36 : vector<2x1xf32>
    %39 = arith.divf %37, %38 : vector<2x1xf32>
    %cst_21 = arith.constant 1.000000e+00 : f32
    %40 = vector.broadcast %cst_21 : f32 to vector<2x1xf32>
    %41 = arith.subf %40, %39 : vector<2x1xf32>
    %c0_22 = arith.constant 0 : index
    %c0_23 = arith.constant 0 : index
    %42 = vector.load %arg8[%c0_22, %c0_23] : memref<2x1xf32, #tpu.memory_space<vmem>>, vector<2x1xf32>
    tpu.vector_store %arg8[%c0_22, %c0_23], %41 {strides = array<i32>} : memref<2x1xf32, #tpu.memory_space<vmem>>, vector<2x1xf32>,
    return
  }
  func.func @transform_0(%arg0: i32, %arg1: i32) -> (i32, i32, i32) {
    %c0_i32 = arith.constant 0 : i32
    %c0_i32_0 = arith.constant 0 : i32
    return %arg0, %arg1, %c0_i32 : i32, i32, i32
  }
  func.func @transform_1(%arg0: i32, %arg1: i32) -> (i32, i32, i32) {
    %c0_i32 = arith.constant 0 : i32
    %c0_i32_0 = arith.constant 0 : i32
    return %arg0, %arg1, %c0_i32 : i32, i32, i32
  }
  func.func @transform_2(%arg0: i32, %arg1: i32) -> (i32, i32) {
    %c0_i32 = arith.constant 0 : i32
    %c0_i32_0 = arith.constant 0 : i32
    %c0_i32_1 = arith.constant 0 : i32
    return %c0_i32, %c0_i32_0 : i32, i32
  }
  func.func @transform_3(%arg0: i32, %arg1: i32) -> (i32, i32) {
    %c0_i32 = arith.constant 0 : i32
    %c0_i32_0 = arith.constant 0 : i32
    %c0_i32_1 = arith.constant 0 : i32
    return %c0_i32, %c0_i32_0 : i32, i32
  }
  func.func @transform_4(%arg0: i32, %arg1: i32) -> (i32, i32) {
    %c0_i32 = arith.constant 0 : i32
    %c0_i32_0 = arith.constant 0 : i32
    %c0_i32_1 = arith.constant 0 : i32
    return %c0_i32, %c0_i32_0 : i32, i32
  }
  func.func @transform_5(%arg0: i32, %arg1: i32) -> (i32, i32) {
    %c0_i32 = arith.constant 0 : i32
    %c0_i32_0 = arith.constant 0 : i32
    %c0_i32_1 = arith.constant 0 : i32
    return %c0_i32, %c0_i32_0 : i32, i32
  }
  func.func @transform_6(%arg0: i32, %arg1: i32) -> (i32, i32) {
    %c0_i32 = arith.constant 0 : i32
    %c0_i32_0 = arith.constant 0 : i32
    return %arg0, %c0_i32 : i32, i32
  }
}

</mosaic_0001>

<llo_original>
// kernel: tpu_custom_call.1
$region0: #{tpu_custom_call.1}
  #allocation0 [shape = 'u32[]', space=smem, size = 0x4, offset = 0x4, fixed_abs, tag = 'smem constant byte address 0x4 - core index']
  #allocation1 [shape = 'u32[144,128]{1,0:T(1,128)}', space=vmem, size = 0x12000, scoped, tag = 'internal scratch']
  #allocation2 [shape = 'f32[1,1]{1,0:T(1,128)S(6)}', space=smem, size = 0x200, scoped, tag = 'scoped memory for tpu_custom_call.1']
  %s0 = inlined_call_operand.hbm [shape: f32[2,8,768], index: 0, kind: input, shape index: {}]
  %s1 = inlined_call_operand.hbm [shape: f32[2,8,768], index: 1, kind: input, shape index: {}]
  %s2 = inlined_call_operand.hbm [shape: f32[768,128], index: 2, kind: input, shape index: {}]
  %s3 = inlined_call_operand.vmem [shape: f32[1,128], index: 3, kind: input, shape index: {}]
  %s4 = inlined_call_operand.vmem [shape: f32[1,128], index: 4, kind: input, shape index: {}]
  %s5 = inlined_call_operand.<no memory space> [shape: f32[1,1], index: 5, kind: input, shape index: {}]
  %s6 = inlined_call_operand.vmem [shape: f32[2,1], index: 6, kind: output, shape index: {}]
  %s7 = sld [smem:[#allocation0]]
  $region46: #{tpu_custom_call.1} parent=0
    _
  %s9 = ssub.s32 1, %s7
  %s10 = scalar_select 0, %s9, %s7
  %11 = sst [smem:[#allocation2]] %s5
  $region1: #{tpu_custom_call.1} parent=0
    #allocation3 [shape = 'u8[49152]{0}', space=vmem, size = 0xc000, scoped, tag = 'input window, operand 0, single buffered']
    #allocation4 [shape = 's32[1]{0}', space=sflag, size = 0x4, scoped, tag = 'scoped memory for tpu_custom_call.1']
    #allocation5 [shape = 'u8[49152]{0}', space=vmem, size = 0xc000, scoped, tag = 'input window, operand 1, single buffered']
    #allocation6 [shape = 's32[1]{0}', space=sflag, size = 0x4, scoped, tag = 'scoped memory for tpu_custom_call.1']
    #allocation7 [shape = 'u8[393216]{0}', space=vmem, size = 0x60000, scoped, tag = 'input window, operand 2, single buffered']
    %12 = vsyncpa [#allocation4], 0
    %13 = vsyncpa [#allocation6], 0
    // Predicated region
    $region2: #{tpu_custom_call.1} parent=1 // pred_check
      _
    $region3: #{tpu_custom_call.1} parent=1 // pred_check_branch
      %15 = sbr.rel (0) target = $region5
    $region4: #{tpu_custom_call.1} parent=1 // pred_region
      %s17 = ssub.s32 1536, 1536
      %18 = vsyncadd [#allocation4], %s17
      %s19 = sshll.u32 [#allocation3], 4
      %s20 = int_to_ptr.vmem [resolvable:$true] %s19
      %25 = dma.hbm_to_vmem [thread:$0]  %s0, 1536, %s20, [#allocation4], 768, 768, 48
    $region5: #{tpu_custom_call.1} parent=1 // pred_fallthru
      _
    // Predicated region
    $region6: #{tpu_custom_call.1} parent=1 // pred_check
      _
    $region7: #{tpu_custom_call.1} parent=1 // pred_check_branch
      %27 = sbr.rel (0) target = $region9
    $region8: #{tpu_custom_call.1} parent=1 // pred_region
      %s29 = ssub.s32 1536, 1536
      %30 = vsyncadd [#allocation6], %s29
      %s31 = sshll.u32 [#allocation5], 4
      %s32 = int_to_ptr.vmem [resolvable:$true] %s31
      %37 = dma.hbm_to_vmem [thread:$0]  %s1, 1536, %s32, [#allocation6], 768, 768, 48
    $region9: #{tpu_custom_call.1} parent=1 // pred_fallthru
      _
    // Predicated region
    $region10: #{tpu_custom_call.1} parent=1 // pred_check
      _
    $region11: #{tpu_custom_call.1} parent=1 // pred_check_branch
      %39 = sbr.rel (0) target = $region13
    $region12: #{tpu_custom_call.1} parent=1 // pred_region
      %s41 = ssub.s32 12288, 12288
      %42 = vsyncadd [#allocation6], %s41
      %s43 = sshll.u32 [#allocation7], 4
      %s44 = int_to_ptr.vmem [resolvable:$true] %s43
      %49 = dma.hbm_to_vmem [thread:$0]  %s2, 12288, %s44, [#allocation6], 128, 128, 8
    $region13: #{tpu_custom_call.1} parent=1 // pred_fallthru
      _
    // Predicated region
    $region14: #{tpu_custom_call.1} parent=1 // pred_check
      _
    $region15: #{tpu_custom_call.1} parent=1 // pred_check_branch
      %51 = sbr.rel (0) target = $region17
    $region16: #{tpu_custom_call.1} parent=1 // pred_region
      _
    $region17: #{tpu_custom_call.1} parent=1 // pred_fallthru
      _
    // Predicated region
    $region18: #{tpu_custom_call.1} parent=1 // pred_check
      _
    $region19: #{tpu_custom_call.1} parent=1 // pred_check_branch
      %53 = sbr.rel (0) target = $region21
    $region20: #{tpu_custom_call.1} parent=1 // pred_region
      _
    $region21: #{tpu_custom_call.1} parent=1 // pred_fallthru
      _
    // Predicated region
    $region22: #{tpu_custom_call.1} parent=1 // pred_check
      _
    $region23: #{tpu_custom_call.1} parent=1 // pred_check_branch
      %55 = sbr.rel (0) target = $region25
    $region24: #{tpu_custom_call.1} parent=1 // pred_region
      _
    $region25: #{tpu_custom_call.1} parent=1 // pred_fallthru
      _
    // Predicated region
    $region26: #{tpu_custom_call.1} parent=1 // pred_check
      _
    $region27: #{tpu_custom_call.1} parent=1 // pred_check_branch
      %57 = sbr.rel (0) target = $region29
    $region28: #{tpu_custom_call.1} parent=1 // pred_region
      %58 = dma.done [#allocation4], 1536
    $region29: #{tpu_custom_call.1} parent=1 // pred_fallthru
      _
    // Predicated region
    $region30: #{tpu_custom_call.1} parent=1 // pred_check
      _
    $region31: #{tpu_custom_call.1} parent=1 // pred_check_branch
      %60 = sbr.rel (0) target = $region33
    $region32: #{tpu_custom_call.1} parent=1 // pred_region
      %61 = dma.done [#allocation6], 1536
    $region33: #{tpu_custom_call.1} parent=1 // pred_fallthru
      _
    // Predicated region
    $region34: #{tpu_custom_call.1} parent=1 // pred_check
      _
    $region35: #{tpu_custom_call.1} parent=1 // pred_check_branch
      %63 = sbr.rel (0) target = $region37
    $region36: #{tpu_custom_call.1} parent=1 // pred_region
      %64 = dma.done [#allocation6], 12288
    $region37: #{tpu_custom_call.1} parent=1 // pred_fallthru
      _
    %v65 = vld [vmem:[#allocation7] sm:$0xff]
    %v66 = vld [vmem:[#allocation7 + $0x8] sm:$0xff]
    %v67 = vld [vmem:[#allocation7 + $0x10] sm:$0xff]
    %v68 = vld [vmem:[#allocation7 + $0x18] sm:$0xff]
    %v69 = vld [vmem:[#allocation7 + $0x20] sm:$0xff]
    %v70 = vld [vmem:[#allocation7 + $0x28] sm:$0xff]
    %v71 = vld [vmem:[#allocation7 + $0x30] sm:$0xff]
    %v72 = vld [vmem:[#allocation7 + $0x38] sm:$0xff]
    %v73 = vld [vmem:[#allocation7 + $0x40] sm:$0xff]
    %v74 = vld [vmem:[#allocation7 + $0x48] sm:$0xff]
    %v75 = vld [vmem:[#allocation7 + $0x50] sm:$0xff]
    %v76 = vld [vmem:[#allocation7 + $0x58] sm:$0xff]
    %v77 = vld [vmem:[#allocation7 + $0x60] sm:$0xff]
    %v78 = vld [vmem:[#allocation7 + $0x68] sm:$0xff]
    %v79 = vld [vmem:[#allocation7 + $0x70] sm:$0xff]
    %v80 = vld [vmem:[#allocation7 + $0x78] sm:$0xff]
    %v81 = vld [vmem:[#allocation7 + $0x80] sm:$0xff]
    %v82 = vld [vmem:[#allocation7 + $0x88] sm:$0xff]
    %v83 = vld [vmem:[#allocation7 + $0x90] sm:$0xff]
    %v84 = vld [vmem:[#allocation7 + $0x98] sm:$0xff]
    %v85 = vld [vmem:[#allocation7 + $0xa0] sm:$0xff]
    %v86 = vld [vmem:[#allocation7 + $0xa8] sm:$0xff]
    %v87 = vld [vmem:[#allocation7 + $0xb0] sm:$0xff]
    %v88 = vld [vmem:[#allocation7 + $0xb8] sm:$0xff]
    %v89 = vld [vmem:[#allocation7 + $0xc0] sm:$0xff]
    %v90 = vld [vmem:[#allocation7 + $0xc8] sm:$0xff]
    %v91 = vld [vmem:[#allocation7 + $0xd0] sm:$0xff]
    %v92 = vld [vmem:[#allocation7 + $0xd8] sm:$0xff]
    %v93 = vld [vmem:[#allocation7 + $0xe0] sm:$0xff]
    %v94 = vld [vmem:[#allocation7 + $0xe8] sm:$0xff]
    %v95 = vld [vmem:[#allocation7 + $0xf0] sm:$0xff]
    %v96 = vld [vmem:[#allocation7 + $0xf8] sm:$0xff]
    %v97 = vld [vmem:[#allocation7 + $0x100] sm:$0xff]
    %v98 = vld [vmem:[#allocation7 + $0x108] sm:$0xff]
    %v99 = vld [vmem:[#allocation7 + $0x110] sm:$0xff]
    %v100 = vld [vmem:[#allocation7 + $0x118] sm:$0xff]
    %v101 = vld [vmem:[#allocation7 + $0x120] sm:$0xff]
    %v102 = vld [vmem:[#allocation7 + $0x128] sm:$0xff]
    %v103 = vld [vmem:[#allocation7 + $0x130] sm:$0xff]
    %v104 = vld [vmem:[#allocation7 + $0x138] sm:$0xff]
    %v105 = vld [vmem:[#allocation7 + $0x140] sm:$0xff]
    %v106 = vld [vmem:[#allocation7 + $0x148] sm:$0xff]
    %v107 = vld [vmem:[#allocation7 + $0x150] sm:$0xff]
    %v108 = vld [vmem:[#allocation7 + $0x158] sm:$0xff]
    %v109 = vld [vmem:[#allocation7 + $0x160] sm:$0xff]
    %v110 = vld [vmem:[#allocation7 + $0x168] sm:$0xff]
    %v111 = vld [vmem:[#allocation7 + $0x170] sm:$0xff]
    %v112 = vld [vmem:[#allocation7 + $0x178] sm:$0xff]
    %v113 = vld [vmem:[#allocation7 + $0x180] sm:$0xff]
    %v114 = vld [vmem:[#allocation7 + $0x188] sm:$0xff]
    %v115 = vld [vmem:[#allocation7 + $0x190] sm:$0xff]
    %v116 = vld [vmem:[#allocation7 + $0x198] sm:$0xff]
    %v117 = vld [vmem:[#allocation7 + $0x1a0] sm:$0xff]
    %v118 = vld [vmem:[#allocation7 + $0x1a8] sm:$0xff]
    %v119 = vld [vmem:[#allocation7 + $0x1b0] sm:$0xff]
    %v120 = vld [vmem:[#allocation7 + $0x1b8] sm:$0xff]
    %v121 = vld [vmem:[#allocation7 + $0x1c0] sm:$0xff]
    %v122 = vld [vmem:[#allocation7 + $0x1c8] sm:$0xff]
    %v123 = vld [vmem:[#allocation7 + $0x1d0] sm:$0xff]
    %v124 = vld [vmem:[#allocation7 + $0x1d8] sm:$0xff]
    %v125 = vld [vmem:[#allocation7 + $0x1e0] sm:$0xff]
    %v126 = vld [vmem:[#allocation7 + $0x1e8] sm:$0xff]
    %v127 = vld [vmem:[#allocation7 + $0x1f0] sm:$0xff]
    %v128 = vld [vmem:[#allocation7 + $0x1f8] sm:$0xff]
    %v129 = vld [vmem:[#allocation7 + $0x200] sm:$0xff]
    %v130 = vld [vmem:[#allocation7 + $0x208] sm:$0xff]
    %v131 = vld [vmem:[#allocation7 + $0x210] sm:$0xff]
    %v132 = vld [vmem:[#allocation7 + $0x218] sm:$0xff]
    %v133 = vld [vmem:[#allocation7 + $0x220] sm:$0xff]
    %v134 = vld [vmem:[#allocation7 + $0x228] sm:$0xff]
    %v135 = vld [vmem:[#allocation7 + $0x230] sm:$0xff]
    %v136 = vld [vmem:[#allocation7 + $0x238] sm:$0xff]
    %v137 = vld [vmem:[#allocation7 + $0x240] sm:$0xff]
    %v138 = vld [vmem:[#allocation7 + $0x248] sm:$0xff]
    %v139 = vld [vmem:[#allocation7 + $0x250] sm:$0xff]
    %v140 = vld [vmem:[#allocation7 + $0x258] sm:$0xff]
    %v141 = vld [vmem:[#allocation7 + $0x260] sm:$0xff]
    %v142 = vld [vmem:[#allocation7 + $0x268] sm:$0xff]
    %v143 = vld [vmem:[#allocation7 + $0x270] sm:$0xff]
    %v144 = vld [vmem:[#allocation7 + $0x278] sm:$0xff]
    %v145 = vld [vmem:[#allocation7 + $0x280] sm:$0xff]
    %v146 = vld [vmem:[#allocation7 + $0x288] sm:$0xff]
    %v147 = vld [vmem:[#allocation7 + $0x290] sm:$0xff]
    %v148 = vld [vmem:[#allocation7 + $0x298] sm:$0xff]
    %v149 = vld [vmem:[#allocation7 + $0x2a0] sm:$0xff]
    %v150 = vld [vmem:[#allocation7 + $0x2a8] sm:$0xff]
    %v151 = vld [vmem:[#allocation7 + $0x2b0] sm:$0xff]
    %v152 = vld [vmem:[#allocation7 + $0x2b8] sm:$0xff]
    %v153 = vld [vmem:[#allocation7 + $0x2c0] sm:$0xff]
    %v154 = vld [vmem:[#allocation7 + $0x2c8] sm:$0xff]
    %v155 = vld [vmem:[#allocation7 + $0x2d0] sm:$0xff]
    %v156 = vld [vmem:[#allocation7 + $0x2d8] sm:$0xff]
    %v157 = vld [vmem:[#allocation7 + $0x2e0] sm:$0xff]
    %v158 = vld [vmem:[#allocation7 + $0x2e8] sm:$0xff]
    %v159 = vld [vmem:[#allocation7 + $0x2f0] sm:$0xff]
    %v160 = vld [vmem:[#allocation7 + $0x2f8] sm:$0xff]
    %v161 = vld [vmem:[%s3] sm:$0x1]
    %v162 = vld [vmem:[#allocation3] sm:$0xff]
    %v163 = vld [vmem:[#allocation3 + $0x8] sm:$0xff]
    %v164 = vld [vmem:[#allocation3 + $0x10] sm:$0xff]
    %v165 = vld [vmem:[#allocation3 + $0x18] sm:$0xff]
    %v166 = vld [vmem:[#allocation3 + $0x20] sm:$0xff]
    %v167 = vld [vmem:[#allocation3 + $0x28] sm:$0xff]
    %v168 = vld [vmem:[#allocation3 + $0x30] sm:$0xff]
    %v169 = vld [vmem:[#allocation3 + $0x38] sm:$0xff]
    %v170 = vld [vmem:[#allocation3 + $0x40] sm:$0xff]
    %v171 = vld [vmem:[#allocation3 + $0x48] sm:$0xff]
    %v172 = vld [vmem:[#allocation3 + $0x50] sm:$0xff]
    %v173 = vld [vmem:[#allocation3 + $0x58] sm:$0xff]
    %v175 = vlaneseq
    %v176 = vshrl.u32 %v175, 7
    %v177 = vsub.s32 0, %v176
    %v178 = vrot.slane %v161, %v177
    %180 = vmatprep.subr.mxu0 0.0
    %181 = vmatpush1.msra.mxu0 %v80
    %182 = vmatprep.subr.mxu0 0.0
    %183 = vmatpush1.msra.mxu0 %v79
    %184 = vmatprep.subr.mxu0 0.0
    %185 = vmatpush1.msra.mxu0 %v78
    %186 = vmatprep.subr.mxu0 0.0
    %187 = vmatpush1.msra.mxu0 %v77
    %188 = vmatprep.subr.mxu0 0.0
    %189 = vmatpush1.msra.mxu0 %v76
    %190 = vmatprep.subr.mxu0 0.0
    %191 = vmatpush1.msra.mxu0 %v75
    %192 = vmatprep.subr.mxu0 0.0
    %193 = vmatpush1.msra.mxu0 %v74
    %194 = vmatprep.subr.mxu0 0.0
    %195 = vmatpush1.msra.mxu0 %v73
    %196 = vmatprep.subr.mxu0 0.0
    %197 = vmatpush1.msra.mxu0 %v72
    %198 = vmatprep.subr.mxu0 0.0
    %199 = vmatpush1.msra.mxu0 %v71
    %200 = vmatprep.subr.mxu0 0.0
    %201 = vmatpush1.msra.mxu0 %v70
    %202 = vmatprep.subr.mxu0 0.0
    %203 = vmatpush1.msra.mxu0 %v69
    %204 = vmatprep.subr.mxu0 0.0
    %205 = vmatpush1.msra.mxu0 %v68
    %206 = vmatprep.subr.mxu0 0.0
    %207 = vmatpush1.msra.mxu0 %v67
    %208 = vmatprep.subr.mxu0 0.0
    %209 = vmatpush1.msra.mxu0 %v66
    %210 = vmatprep.subr.mxu0 0.0
    %211 = vmatpush1.msra.mxu0 %v65
    %212 = vmatprep.subr.mxu0 0.0
    %213 = vmatpush2.msra.mxu0 %v96
    %214 = vmatprep.subr.mxu0 0.0
    %215 = vmatpush2.msra.mxu0 %v95
    %216 = vmatprep.subr.mxu0 0.0
    %217 = vmatpush2.msra.mxu0 %v94
    %218 = vmatprep.subr.mxu0 0.0
    %219 = vmatpush2.msra.mxu0 %v93
    %220 = vmatprep.subr.mxu0 0.0
    %221 = vmatpush2.msra.mxu0 %v92
    %222 = vmatprep.subr.mxu0 0.0
    %223 = vmatpush2.msra.mxu0 %v91
    %224 = vmatprep.subr.mxu0 0.0
    %225 = vmatpush2.msra.mxu0 %v90
    %226 = vmatprep.subr.mxu0 0.0
    %227 = vmatpush2.msra.mxu0 %v89
    %228 = vmatprep.subr.mxu0 0.0
    %229 = vmatpush2.msra.mxu0 %v88
    %230 = vmatprep.subr.mxu0 0.0
    %231 = vmatpush2.msra.mxu0 %v87
    %232 = vmatprep.subr.mxu0 0.0
    %233 = vmatpush2.msra.mxu0 %v86
    %234 = vmatprep.subr.mxu0 0.0
    %235 = vmatpush2.msra.mxu0 %v85
    %236 = vmatprep.subr.mxu0 0.0
    %237 = vmatpush2.msra.mxu0 %v84
    %238 = vmatprep.subr.mxu0 0.0
    %239 = vmatpush2.msra.mxu0 %v83
    %240 = vmatprep.subr.mxu0 0.0
    %241 = vmatpush2.msra.mxu0 %v82
    %242 = vmatprep.subr.mxu0 0.0
    %243 = vmatpush2.msra.mxu0 %v81
    %244 = vmatprep.mubr.f32.mxu0 %v163
    %245 = vmatmul.mubr.f32.gmra.mxu0 %v162
    %v246 = vpop.f32.mrf.mxu0
    %v247 = vadd.f32 %v178, %v246
    %v248 = vpop.f32.mrf.mxu0
    %249 = vmatprep.mubr.f32.mxu0 %v169
    %250 = vmatmul.mubr.f32.gmra.mxu0 %v168
    %v251 = vpop.f32.mrf.mxu0
    %v252 = vadd.f32 %v178, %v251
    %v253 = vpop.f32.mrf.mxu0
    %254 = vdwg.mxu0
    %255 = vmatprep.subr.mxu0 0.0
    %256 = vmatpush1.msra.mxu0 %v112
    %257 = vmatprep.subr.mxu0 0.0
    %258 = vmatpush1.msra.mxu0 %v111
    %259 = vmatprep.subr.mxu0 0.0
    %260 = vmatpush1.msra.mxu0 %v110
    %261 = vmatprep.subr.mxu0 0.0
    %262 = vmatpush1.msra.mxu0 %v109
    %263 = vmatprep.subr.mxu0 0.0
    %264 = vmatpush1.msra.mxu0 %v108
    %265 = vmatprep.subr.mxu0 0.0
    %266 = vmatpush1.msra.mxu0 %v107
    %267 = vmatprep.subr.mxu0 0.0
    %268 = vmatpush1.msra.mxu0 %v106
    %269 = vmatprep.subr.mxu0 0.0
    %270 = vmatpush1.msra.mxu0 %v105
    %271 = vmatprep.subr.mxu0 0.0
    %272 = vmatpush1.msra.mxu0 %v104
    %273 = vmatprep.subr.mxu0 0.0
    %274 = vmatpush1.msra.mxu0 %v103
    %275 = vmatprep.subr.mxu0 0.0
    %276 = vmatpush1.msra.mxu0 %v102
    %277 = vmatprep.subr.mxu0 0.0
    %278 = vmatpush1.msra.mxu0 %v101
    %279 = vmatprep.subr.mxu0 0.0
    %280 = vmatpush1.msra.mxu0 %v100
    %281 = vmatprep.subr.mxu0 0.0
    %282 = vmatpush1.msra.mxu0 %v99
    %283 = vmatprep.subr.mxu0 0.0
    %284 = vmatpush1.msra.mxu0 %v98
    %285 = vmatprep.subr.mxu0 0.0
    %286 = vmatpush1.msra.mxu0 %v97
    %287 = vmatprep.subr.mxu0 0.0
    %288 = vmatpush2.msra.mxu0 %v128
    %289 = vmatprep.subr.mxu0 0.0
    %290 = vmatpush2.msra.mxu0 %v127
    %291 = vmatprep.subr.mxu0 0.0
    %292 = vmatpush2.msra.mxu0 %v126
    %293 = vmatprep.subr.mxu0 0.0
    %294 = vmatpush2.msra.mxu0 %v125
    %295 = vmatprep.subr.mxu0 0.0
    %296 = vmatpush2.msra.mxu0 %v124
    %297 = vmatprep.subr.mxu0 0.0
    %298 = vmatpush2.msra.mxu0 %v123
    %299 = vmatprep.subr.mxu0 0.0
    %300 = vmatpush2.msra.mxu0 %v122
    %301 = vmatprep.subr.mxu0 0.0
    %302 = vmatpush2.msra.mxu0 %v121
    %303 = vmatprep.subr.mxu0 0.0
    %304 = vmatpush2.msra.mxu0 %v120
    %305 = vmatprep.subr.mxu0 0.0
    %306 = vmatpush2.msra.mxu0 %v119
    %307 = vmatprep.subr.mxu0 0.0
    %308 = vmatpush2.msra.mxu0 %v118
    %309 = vmatprep.subr.mxu0 0.0
    %310 = vmatpush2.msra.mxu0 %v117
    %311 = vmatprep.subr.mxu0 0.0
    %312 = vmatpush2.msra.mxu0 %v116
    %313 = vmatprep.subr.mxu0 0.0
    %314 = vmatpush2.msra.mxu0 %v115
    %315 = vmatprep.subr.mxu0 0.0
    %316 = vmatpush2.msra.mxu0 %v114
    %317 = vmatprep.subr.mxu0 0.0
    %318 = vmatpush2.msra.mxu0 %v113
    %319 = vmatprep.mubr.f32.mxu0 %v165
    %320 = vmatmul.mubr.f32.gmra.mxu0 %v164
    %v321 = vpop.f32.mrf.mxu0
    %v322 = vadd.f32 %v247, %v321
    %v323 = vpop.f32.mrf.mxu0
    %324 = vmatprep.mubr.f32.mxu0 %v171
    %325 = vmatmul.mubr.f32.gmra.mxu0 %v170
    %v326 = vpop.f32.mrf.mxu0
    %v327 = vadd.f32 %v252, %v326
    %v328 = vpop.f32.mrf.mxu0
    %329 = vdwg.mxu0
    %330 = vmatprep.subr.mxu0 0.0
    %331 = vmatpush1.msra.mxu0 %v144
    %332 = vmatprep.subr.mxu0 0.0
    %333 = vmatpush1.msra.mxu0 %v143
    %334 = vmatprep.subr.mxu0 0.0
    %335 = vmatpush1.msra.mxu0 %v142
    %336 = vmatprep.subr.mxu0 0.0
    %337 = vmatpush1.msra.mxu0 %v141
    %338 = vmatprep.subr.mxu0 0.0
    %339 = vmatpush1.msra.mxu0 %v140
    %340 = vmatprep.subr.mxu0 0.0
    %341 = vmatpush1.msra.mxu0 %v139
    %342 = vmatprep.subr.mxu0 0.0
    %343 = vmatpush1.msra.mxu0 %v138
    %344 = vmatprep.subr.mxu0 0.0
    %345 = vmatpush1.msra.mxu0 %v137
    %346 = vmatprep.subr.mxu0 0.0
    %347 = vmatpush1.msra.mxu0 %v136
    %348 = vmatprep.subr.mxu0 0.0
    %349 = vmatpush1.msra.mxu0 %v135
    %350 = vmatprep.subr.mxu0 0.0
    %351 = vmatpush1.msra.mxu0 %v134
    %352 = vmatprep.subr.mxu0 0.0
    %353 = vmatpush1.msra.mxu0 %v133
    %354 = vmatprep.subr.mxu0 0.0
    %355 = vmatpush1.msra.mxu0 %v132
    %356 = vmatprep.subr.mxu0 0.0
    %357 = vmatpush1.msra.mxu0 %v131
    %358 = vmatprep.subr.mxu0 0.0
    %359 = vmatpush1.msra.mxu0 %v130
    %360 = vmatprep.subr.mxu0 0.0
    %361 = vmatpush1.msra.mxu0 %v129
    %362 = vmatprep.subr.mxu0 0.0
    %363 = vmatpush2.msra.mxu0 %v160
    %364 = vmatprep.subr.mxu0 0.0
    %365 = vmatpush2.msra.mxu0 %v159
    %366 = vmatprep.subr.mxu0 0.0
    %367 = vmatpush2.msra.mxu0 %v158
    %368 = vmatprep.subr.mxu0 0.0
    %369 = vmatpush2.msra.mxu0 %v157
    %370 = vmatprep.subr.mxu0 0.0
    %371 = vmatpush2.msra.mxu0 %v156
    %372 = vmatprep.subr.mxu0 0.0
    %373 = vmatpush2.msra.mxu0 %v155
    %374 = vmatprep.subr.mxu0 0.0
    %375 = vmatpush2.msra.mxu0 %v154
    %376 = vmatprep.subr.mxu0 0.0
    %377 = vmatpush2.msra.mxu0 %v153
    %378 = vmatprep.subr.mxu0 0.0
    %379 = vmatpush2.msra.mxu0 %v152
    %380 = vmatprep.subr.mxu0 0.0
    %381 = vmatpush2.msra.mxu0 %v151
    %382 = vmatprep.subr.mxu0 0.0
    %383 = vmatpush2.msra.mxu0 %v150
    %384 = vmatprep.subr.mxu0 0.0
    %385 = vmatpush2.msra.mxu0 %v149
    %386 = vmatprep.subr.mxu0 0.0
    %387 = vmatpush2.msra.mxu0 %v148
    %388 = vmatprep.subr.mxu0 0.0
    %389 = vmatpush2.msra.mxu0 %v147
    %390 = vmatprep.subr.mxu0 0.0
    %391 = vmatpush2.msra.mxu0 %v146
    %392 = vmatprep.subr.mxu0 0.0
    %393 = vmatpush2.msra.mxu0 %v145
    %394 = vmatprep.mubr.f32.mxu0 %v167
    %395 = vmatmul.mubr.f32.gmra.mxu0 %v166
    %v396 = vpop.f32.mrf.mxu0
    %v397 = vadd.f32 %v322, %v396
    %v398 = vpop.f32.mrf.mxu0
    %399 = vmatprep.mubr.f32.mxu0 %v173
    %400 = vmatmul.mubr.f32.gmra.mxu0 %v172
    %v401 = vpop.f32.mrf.mxu0
    %v402 = vadd.f32 %v327, %v401
    %v403 = vpop.f32.mrf.mxu0
    %404 = vdwg.mxu0
    %v405 = vmax.f32 %v397, 0.0
    %v406 = vmax.f32 %v402, 0.0
    %v407 = vrot.slane %v405, 4
    %v408 = vadd.f32 %v405, %v407
    %v409 = vrot.slane %v408, 2
    %v410 = vadd.f32 %v408, %v409
    %v411 = vrot.slane %v410, 1
    %v412 = vadd.f32 %v410, %v411
    %v413 = vrot.slane %v406, 4
    %v414 = vadd.f32 %v406, %v413
    %v415 = vrot.slane %v414, 2
    %v416 = vadd.f32 %v414, %v415
    %v417 = vrot.slane %v416, 1
    %v418 = vadd.f32 %v416, %v417
    %v419 = vld [vmem:[#allocation5] sm:$0xff]
    %v420 = vld [vmem:[#allocation5 + $0x8] sm:$0xff]
    %v421 = vld [vmem:[#allocation5 + $0x10] sm:$0xff]
    %v422 = vld [vmem:[#allocation5 + $0x18] sm:$0xff]
    %v423 = vld [vmem:[#allocation5 + $0x20] sm:$0xff]
    %v424 = vld [vmem:[#allocation5 + $0x28] sm:$0xff]
    %v425 = vld [vmem:[#allocation5 + $0x30] sm:$0xff]
    %v426 = vld [vmem:[#allocation5 + $0x38] sm:$0xff]
    %v427 = vld [vmem:[#allocation5 + $0x40] sm:$0xff]
    %v428 = vld [vmem:[#allocation5 + $0x48] sm:$0xff]
    %v429 = vld [vmem:[#allocation5 + $0x50] sm:$0xff]
    %v430 = vld [vmem:[#allocation5 + $0x58] sm:$0xff]
    %431 = vmatprep.subr.mxu0 0.0
    %432 = vmatpush1.msra.mxu0 %v80
    %433 = vmatprep.subr.mxu0 0.0
    %434 = vmatpush1.msra.mxu0 %v79
    %435 = vmatprep.subr.mxu0 0.0
    %436 = vmatpush1.msra.mxu0 %v78
    %437 = vmatprep.subr.mxu0 0.0
    %438 = vmatpush1.msra.mxu0 %v77
    %439 = vmatprep.subr.mxu0 0.0
    %440 = vmatpush1.msra.mxu0 %v76
    %441 = vmatprep.subr.mxu0 0.0
    %442 = vmatpush1.msra.mxu0 %v75
    %443 = vmatprep.subr.mxu0 0.0
    %444 = vmatpush1.msra.mxu0 %v74
    %445 = vmatprep.subr.mxu0 0.0
    %446 = vmatpush1.msra.mxu0 %v73
    %447 = vmatprep.subr.mxu0 0.0
    %448 = vmatpush1.msra.mxu0 %v72
    %449 = vmatprep.subr.mxu0 0.0
    %450 = vmatpush1.msra.mxu0 %v71
    %451 = vmatprep.subr.mxu0 0.0
    %452 = vmatpush1.msra.mxu0 %v70
    %453 = vmatprep.subr.mxu0 0.0
    %454 = vmatpush1.msra.mxu0 %v69
    %455 = vmatprep.subr.mxu0 0.0
    %456 = vmatpush1.msra.mxu0 %v68
    %457 = vmatprep.subr.mxu0 0.0
    %458 = vmatpush1.msra.mxu0 %v67
    %459 = vmatprep.subr.mxu0 0.0
    %460 = vmatpush1.msra.mxu0 %v66
    %461 = vmatprep.subr.mxu0 0.0
    %462 = vmatpush1.msra.mxu0 %v65
    %463 = vmatprep.subr.mxu0 0.0
    %464 = vmatpush2.msra.mxu0 %v96
    %465 = vmatprep.subr.mxu0 0.0
    %466 = vmatpush2.msra.mxu0 %v95
    %467 = vmatprep.subr.mxu0 0.0
    %468 = vmatpush2.msra.mxu0 %v94
    %469 = vmatprep.subr.mxu0 0.0
    %470 = vmatpush2.msra.mxu0 %v93
    %471 = vmatprep.subr.mxu0 0.0
    %472 = vmatpush2.msra.mxu0 %v92
    %473 = vmatprep.subr.mxu0 0.0
    %474 = vmatpush2.msra.mxu0 %v91
    %475 = vmatprep.subr.mxu0 0.0
    %476 = vmatpush2.msra.mxu0 %v90
    %477 = vmatprep.subr.mxu0 0.0
    %478 = vmatpush2.msra.mxu0 %v89
    %479 = vmatprep.subr.mxu0 0.0
    %480 = vmatpush2.msra.mxu0 %v88
    %481 = vmatprep.subr.mxu0 0.0
    %482 = vmatpush2.msra.mxu0 %v87
    %483 = vmatprep.subr.mxu0 0.0
    %484 = vmatpush2.msra.mxu0 %v86
    %485 = vmatprep.subr.mxu0 0.0
    %486 = vmatpush2.msra.mxu0 %v85
    %487 = vmatprep.subr.mxu0 0.0
    %488 = vmatpush2.msra.mxu0 %v84
    %489 = vmatprep.subr.mxu0 0.0
    %490 = vmatpush2.msra.mxu0 %v83
    %491 = vmatprep.subr.mxu0 0.0
    %492 = vmatpush2.msra.mxu0 %v82
    %493 = vmatprep.subr.mxu0 0.0
    %494 = vmatpush2.msra.mxu0 %v81
    %495 = vmatprep.mubr.f32.mxu0 %v420
    %496 = vmatmul.mubr.f32.gmra.mxu0 %v419
    %v497 = vpop.f32.mrf.mxu0
    %v498 = vadd.f32 %v178, %v497
    %v499 = vpop.f32.mrf.mxu0
    %500 = vmatprep.mubr.f32.mxu0 %v426
    %501 = vmatmul.mubr.f32.gmra.mxu0 %v425
    %v502 = vpop.f32.mrf.mxu0
    %v503 = vadd.f32 %v178, %v502
    %v504 = vpop.f32.mrf.mxu0
    %505 = vdwg.mxu0
    %506 = vmatprep.subr.mxu0 0.0
    %507 = vmatpush1.msra.mxu0 %v112
    %508 = vmatprep.subr.mxu0 0.0
    %509 = vmatpush1.msra.mxu0 %v111
    %510 = vmatprep.subr.mxu0 0.0
    %511 = vmatpush1.msra.mxu0 %v110
    %512 = vmatprep.subr.mxu0 0.0
    %513 = vmatpush1.msra.mxu0 %v109
    %514 = vmatprep.subr.mxu0 0.0
    %515 = vmatpush1.msra.mxu0 %v108
    %516 = vmatprep.subr.mxu0 0.0
    %517 = vmatpush1.msra.mxu0 %v107
    %518 = vmatprep.subr.mxu0 0.0
    %519 = vmatpush1.msra.mxu0 %v106
    %520 = vmatprep.subr.mxu0 0.0
    %521 = vmatpush1.msra.mxu0 %v105
    %522 = vmatprep.subr.mxu0 0.0
    %523 = vmatpush1.msra.mxu0 %v104
    %524 = vmatprep.subr.mxu0 0.0
    %525 = vmatpush1.msra.mxu0 %v103
    %526 = vmatprep.subr.mxu0 0.0
    %527 = vmatpush1.msra.mxu0 %v102
    %528 = vmatprep.subr.mxu0 0.0
    %529 = vmatpush1.msra.mxu0 %v101
    %530 = vmatprep.subr.mxu0 0.0
    %531 = vmatpush1.msra.mxu0 %v100
    %532 = vmatprep.subr.mxu0 0.0
    %533 = vmatpush1.msra.mxu0 %v99
    %534 = vmatprep.subr.mxu0 0.0
    %535 = vmatpush1.msra.mxu0 %v98
    %536 = vmatprep.subr.mxu0 0.0
    %537 = vmatpush1.msra.mxu0 %v97
    %538 = vmatprep.subr.mxu0 0.0
    %539 = vmatpush2.msra.mxu0 %v128
    %540 = vmatprep.subr.mxu0 0.0
    %541 = vmatpush2.msra.mxu0 %v127
    %542 = vmatprep.subr.mxu0 0.0
    %543 = vmatpush2.msra.mxu0 %v126
    %544 = vmatprep.subr.mxu0 0.0
    %545 = vmatpush2.msra.mxu0 %v125
    %546 = vmatprep.subr.mxu0 0.0
    %547 = vmatpush2.msra.mxu0 %v124
    %548 = vmatprep.subr.mxu0 0.0
    %549 = vmatpush2.msra.mxu0 %v123
    %550 = vmatprep.subr.mxu0 0.0
    %551 = vmatpush2.msra.mxu0 %v122
    %552 = vmatprep.subr.mxu0 0.0
    %553 = vmatpush2.msra.mxu0 %v121
    %554 = vmatprep.subr.mxu0 0.0
    %555 = vmatpush2.msra.mxu0 %v120
    %556 = vmatprep.subr.mxu0 0.0
    %557 = vmatpush2.msra.mxu0 %v119
    %558 = vmatprep.subr.mxu0 0.0
    %559 = vmatpush2.msra.mxu0 %v118
    %560 = vmatprep.subr.mxu0 0.0
    %561 = vmatpush2.msra.mxu0 %v117
    %562 = vmatprep.subr.mxu0 0.0
    %563 = vmatpush2.msra.mxu0 %v116
    %564 = vmatprep.subr.mxu0 0.0
    %565 = vmatpush2.msra.mxu0 %v115
    %566 = vmatprep.subr.mxu0 0.0
    %567 = vmatpush2.msra.mxu0 %v114
    %568 = vmatprep.subr.mxu0 0.0
    %569 = vmatpush2.msra.mxu0 %v113
    %570 = vmatprep.mubr.f32.mxu0 %v422
    %571 = vmatmul.mubr.f32.gmra.mxu0 %v421
    %v572 = vpop.f32.mrf.mxu0
    %v573 = vadd.f32 %v498, %v572
    %v574 = vpop.f32.mrf.mxu0
    %575 = vmatprep.mubr.f32.mxu0 %v428
    %576 = vmatmul.mubr.f32.gmra.mxu0 %v427
    %v577 = vpop.f32.mrf.mxu0
    %v578 = vadd.f32 %v503, %v577
    %v579 = vpop.f32.mrf.mxu0
    %580 = vdwg.mxu0
    %581 = vmatprep.subr.mxu0 0.0
    %582 = vmatpush1.msra.mxu0 %v144
    %583 = vmatprep.subr.mxu0 0.0
    %584 = vmatpush1.msra.mxu0 %v143
    %585 = vmatprep.subr.mxu0 0.0
    %586 = vmatpush1.msra.mxu0 %v142
    %587 = vmatprep.subr.mxu0 0.0
    %588 = vmatpush1.msra.mxu0 %v141
    %589 = vmatprep.subr.mxu0 0.0
    %590 = vmatpush1.msra.mxu0 %v140
    %591 = vmatprep.subr.mxu0 0.0
    %592 = vmatpush1.msra.mxu0 %v139
    %593 = vmatprep.subr.mxu0 0.0
    %594 = vmatpush1.msra.mxu0 %v138
    %595 = vmatprep.subr.mxu0 0.0
    %596 = vmatpush1.msra.mxu0 %v137
    %597 = vmatprep.subr.mxu0 0.0
    %598 = vmatpush1.msra.mxu0 %v136
    %599 = vmatprep.subr.mxu0 0.0
    %600 = vmatpush1.msra.mxu0 %v135
    %601 = vmatprep.subr.mxu0 0.0
    %602 = vmatpush1.msra.mxu0 %v134
    %603 = vmatprep.subr.mxu0 0.0
    %604 = vmatpush1.msra.mxu0 %v133
    %605 = vmatprep.subr.mxu0 0.0
    %606 = vmatpush1.msra.mxu0 %v132
    %607 = vmatprep.subr.mxu0 0.0
    %608 = vmatpush1.msra.mxu0 %v131
    %609 = vmatprep.subr.mxu0 0.0
    %610 = vmatpush1.msra.mxu0 %v130
    %611 = vmatprep.subr.mxu0 0.0
    %612 = vmatpush1.msra.mxu0 %v129
    %613 = vmatprep.subr.mxu0 0.0
    %614 = vmatpush2.msra.mxu0 %v160
    %615 = vmatprep.subr.mxu0 0.0
    %616 = vmatpush2.msra.mxu0 %v159
    %617 = vmatprep.subr.mxu0 0.0
    %618 = vmatpush2.msra.mxu0 %v158
    %619 = vmatprep.subr.mxu0 0.0
    %620 = vmatpush2.msra.mxu0 %v157
    %621 = vmatprep.subr.mxu0 0.0
    %622 = vmatpush2.msra.mxu0 %v156
    %623 = vmatprep.subr.mxu0 0.0
    %624 = vmatpush2.msra.mxu0 %v155
    %625 = vmatprep.subr.mxu0 0.0
    %626 = vmatpush2.msra.mxu0 %v154
    %627 = vmatprep.subr.mxu0 0.0
    %628 = vmatpush2.msra.mxu0 %v153
    %629 = vmatprep.subr.mxu0 0.0
    %630 = vmatpush2.msra.mxu0 %v152
    %631 = vmatprep.subr.mxu0 0.0
    %632 = vmatpush2.msra.mxu0 %v151
    %633 = vmatprep.subr.mxu0 0.0
    %634 = vmatpush2.msra.mxu0 %v150
    %635 = vmatprep.subr.mxu0 0.0
    %636 = vmatpush2.msra.mxu0 %v149
    %637 = vmatprep.subr.mxu0 0.0
    %638 = vmatpush2.msra.mxu0 %v148
    %639 = vmatprep.subr.mxu0 0.0
    %640 = vmatpush2.msra.mxu0 %v147
    %641 = vmatprep.subr.mxu0 0.0
    %642 = vmatpush2.msra.mxu0 %v146
    %643 = vmatprep.subr.mxu0 0.0
    %644 = vmatpush2.msra.mxu0 %v145
    %645 = vmatprep.mubr.f32.mxu0 %v424
    %646 = vmatmul.mubr.f32.gmra.mxu0 %v423
    %v647 = vpop.f32.mrf.mxu0
    %v648 = vadd.f32 %v573, %v647
    %v649 = vpop.f32.mrf.mxu0
    %650 = vmatprep.mubr.f32.mxu0 %v430
    %651 = vmatmul.mubr.f32.gmra.mxu0 %v429
    %v652 = vpop.f32.mrf.mxu0
    %v653 = vadd.f32 %v578, %v652
    %v654 = vpop.f32.mrf.mxu0
    %655 = vdwg.mxu0
    %v656 = vmax.f32 %v648, 0.0
    %v657 = vmax.f32 %v653, 0.0
    %v658 = vrot.slane %v656, 4
    %v659 = vadd.f32 %v656, %v658
    %v660 = vrot.slane %v659, 2
    %v661 = vadd.f32 %v659, %v660
    %v662 = vrot.slane %v661, 1
    %v663 = vadd.f32 %v661, %v662
    %v664 = vrot.slane %v657, 4
    %v665 = vadd.f32 %v657, %v664
    %v666 = vrot.slane %v665, 2
    %v667 = vadd.f32 %v665, %v666
    %v668 = vrot.slane %v667, 1
    %v669 = vadd.f32 %v667, %v668
    %v670 = vld [vmem:[%s4] sm:$0x1]
    %s671 = sld [smem:[#allocation2]]
    %v673 = vlaneseq
    %v674 = vshrl.u32 %v673, 7
    %v675 = vsub.s32 0, %v674
    %v676 = vrot.slane %v670, %v675
    %v678 = vmul.f32 %v412, %v676
    %v679 = vmul.f32 %v418, %v676
    %v682 = vrot.slane %v679, 7
    %vm683 = vcmask 1041409
    %v684 = vsel %vm683, %v682, %v678
    %vm686 = vcmask 1041408
    %v687 = vsel %vm686, %v684, 0.0
    %688 = vadd.xlane.f32.xlu0 %v687
    %v689 = vpop.xlane.xlu0 %688
    %v690 = vstv %s671
    %v691 = vadd.f32 %v689, %v690
    %v692 = vmul.f32 %v663, %v676
    %v693 = vmul.f32 %v669, %v676
    %v696 = vrot.slane %v693, 7
    %v697 = vsel %vm683, %v696, %v692
    %v699 = vsel %vm686, %v697, 0.0
    %700 = vadd.xlane.f32.xlu0 %v699
    %v701 = vpop.xlane.xlu0 %700
    %v702 = vadd.f32 %v701, %v690
    %v703 = vsub.f32 %v702, %v691
    %v704 = vxor.u32 %v703, 2147483648
    %v705 = vmul.f32 %v704, 1.442695
    %v706 = vpow.pop %v705
    %v707 = vadd.f32 %v706, 1.0
    %v708 = vrcp.pop %v707
    %v709 = vmul.f32 1.0, %v708
    %v710 = vsub.f32 1.0, %v709
    %vm711 = vcmask 1024
    %712 = vst.msk [vmem:[%s6] sm:$0x3] %vm711, %v710
    // Predicated region
    $region38: #{tpu_custom_call.1} parent=1 // pred_check
      _
    $region39: #{tpu_custom_call.1} parent=1 // pred_check_branch
      %714 = sbr.rel (0) target = $region41
    $region40: #{tpu_custom_call.1} parent=1 // pred_region
      _
    $region41: #{tpu_custom_call.1} parent=1 // pred_fallthru
      _
    // Predicated region
    $region42: #{tpu_custom_call.1} parent=1 // pred_check
      _
    $region43: #{tpu_custom_call.1} parent=1 // pred_check_branch
      %716 = sbr.rel (0) target = $region45
    $region44: #{tpu_custom_call.1} parent=1 // pred_region
      _
    $region45: #{tpu_custom_call.1} parent=1 // pred_fallthru
      _
    %717 = vsyncpa [#allocation4], 1
    %718 = vsyncpa [#allocation6], 1

</llo_original>
